<compile_context>
chip_gen: v7x
topology: tpu7x:2x2x1
jax: 0.10.0
libtpu: 0.0.40
codegen_flags: <defaults>
</compile_context>

<pallas_src>
import functools

import jax
import jax.numpy as jnp
from jax import lax
from jax.experimental import pallas as pl
from jax.experimental.pallas import tpu as pltpu


def _round_up(x, m):
    return ((x + m - 1) // m) * m


def _log_sigmoid(x):
    # numerically stable: log_sigmoid(x) = min(x, 0) - log(1 + exp(-|x|))
    return jnp.minimum(x, 0.0) - jnp.log1p(jnp.exp(-jnp.abs(x)))


def _distmult_loss_kernel(q_ref, a_ref, qn_ref, an_ref, out_ref, acc_ref, *,
                          batch, num_neg, block_b, mask_pad):
    """One batch tile of the DistMult loss.

    q_ref/a_ref   : (block_b, D)          positive query/answer embeddings
    qn_ref/an_ref : (block_b*num_neg, D)  flattened negative embeddings
    out_ref       : (8, 128)              lane-dense per-split partial block
    acc_ref       : (1, 1) f32 VMEM       running (un-normalized) loss sum
    """
    i = pl.program_id(1)          # reduction step within this split
    steps = pl.num_programs(1)

    @pl.when(i == 0)
    def _init():
        acc_ref[...] = jnp.zeros_like(acc_ref)

    # Upcast once (inputs may be bf16); accumulate in f32.
    q = q_ref[...].astype(jnp.float32)
    a = a_ref[...].astype(jnp.float32)
    qn = qn_ref[...].astype(jnp.float32)
    an = an_ref[...].astype(jnp.float32)

    # DistMult score: VPU elementwise multiply + XLU lane reduce over D.
    score_pos = jnp.sum(q * a, axis=-1, keepdims=True)      # (block_b, 1)
    score_neg = jnp.sum(qn * an, axis=-1, keepdims=True)    # (block_b*num_neg, 1)

    loss_pos = -_log_sigmoid(score_pos)                      # (block_b, 1)
    loss_neg = -_log_sigmoid(-score_neg)                     # (block_b*num_neg, 1)

    if mask_pad:
        # Zero contributions of padded batch rows so the mean uses the true B.
        tile_idx = pl.program_id(0) * steps + i
        pos_rows = tile_idx * block_b + lax.broadcasted_iota(
            jnp.int32, loss_pos.shape, 0)
        neg_rows = tile_idx * (block_b * num_neg) + lax.broadcasted_iota(
            jnp.int32, loss_neg.shape, 0)
        loss_pos = jnp.where(pos_rows < batch, loss_pos, 0.0)
        loss_neg = jnp.where(neg_rows < batch * num_neg, loss_neg, 0.0)

    # Per-tile contribution: sum_b [ loss_pos_b + mean_n loss_neg_{b,n} ].
    partial = jnp.sum(loss_pos) + jnp.sum(loss_neg) * (1.0 / num_neg)
    acc_ref[...] += partial

    @pl.when(i == steps - 1)
    def _finalize():
        val = acc_ref[...] * (0.5 / batch)                   # (1, 1)
        out_ref[...] = jnp.broadcast_to(val, out_ref.shape).astype(out_ref.dtype)


def embedding_loss_distmult(query_emb, query_emb_neg, answer_emb, answer_emb_neg,
                            *, block_b=None, vmem_budget_bytes=8 * 1024 * 1024):
    B, D = query_emb.shape
    Bn, N, Dn = query_emb_neg.shape
    assert (Bn, Dn) == (B, D)
    assert answer_emb.shape == (B, D)
    assert answer_emb_neg.shape == (B, N, D)

    itemsize = max(jnp.dtype(query_emb.dtype).itemsize,
                   jnp.dtype(query_emb_neg.dtype).itemsize)

    if block_b is None:
        # Size the batch tile so the double-buffered input footprint stays within
        # a conservative budget (safe on v5e / v6e / v7x scoped VMEM defaults).
        bytes_per_batch_row = 2 * (1 + N) * D * itemsize * 2  # q/a pairs, x2 buffers
        block_b = vmem_budget_bytes // max(1, bytes_per_batch_row)
    block_b = int(max(8, min(block_b, _round_up(B, 8))))
    block_b = (block_b // 8) * 8

    n_tiles = pl.cdiv(B, block_b)
    num_splits = 2 if n_tiles >= 2 else 1        # megacore batch split (v7x)
    steps = pl.cdiv(n_tiles, num_splits)
    b_pad = num_splits * steps * block_b

    q = query_emb
    a = answer_emb
    qn = query_emb_neg.reshape(B * N, D)         # free contiguous reshape
    an = answer_emb_neg.reshape(B * N, D)
    mask_pad = b_pad != B
    if mask_pad:
        q = jnp.pad(q, ((0, b_pad - B), (0, 0)))
        a = jnp.pad(a, ((0, b_pad - B), (0, 0)))
        qn = jnp.pad(qn, ((0, (b_pad - B) * N), (0, 0)))
        an = jnp.pad(an, ((0, (b_pad - B) * N), (0, 0)))

    kernel = functools.partial(
        _distmult_loss_kernel,
        batch=B, num_neg=N, block_b=block_b, mask_pad=mask_pad)

    pos_map = lambda c, i: (c * steps + i, 0)
    neg_map = lambda c, i: (c * steps + i, 0)

    out = pl.pallas_call(
        kernel,
        out_shape=jax.ShapeDtypeStruct((num_splits * 8, 128), jnp.float32),
        grid_spec=pltpu.PrefetchScalarGridSpec(
            num_scalar_prefetch=0,
            grid=(num_splits, steps),
            in_specs=[
                pl.BlockSpec((block_b, D), pos_map),
                pl.BlockSpec((block_b, D), pos_map),
                pl.BlockSpec((block_b * N, D), neg_map),
                pl.BlockSpec((block_b * N, D), neg_map),
            ],
            out_specs=pl.BlockSpec((8, 128), lambda c, i: (c, 0)),
            scratch_shapes=[pltpu.VMEM((1, 1), jnp.float32)],
        ),
        compiler_params=pltpu.CompilerParams(
            dimension_semantics=("parallel", "arbitrary"),
            vmem_limit_bytes=32 * 1024 * 1024,
        ),
    )(q, a, qn, an)

    # Each split's partial loss lives at [c*8, 0]; the partials sum to the loss.
    return jnp.sum(out.reshape(num_splits, 8, 128)[:, 0, 0])


def _reference(query_emb, query_emb_neg, answer_emb, answer_emb_neg):
    score_pos = jnp.sum(query_emb * answer_emb, axis=-1)
    score_neg = jnp.sum(query_emb_neg * answer_emb_neg, axis=-1)
    loss_pos = -jax.nn.log_sigmoid(score_pos)
    loss_neg = jnp.mean(-jax.nn.log_sigmoid(-score_neg), axis=1)
    return jnp.mean(0.5 * (loss_pos + loss_neg))


if __name__ == "__main__":
    key = jax.random.PRNGKey(0)

    # Main test: small shapes consistent with the module.
    B, N, D = 8, 4, 32
    k1, k2, k3, k4 = jax.random.split(key, 4)
    query_emb = jax.random.normal(k1, (B, D), dtype=jnp.float32)
    query_emb_neg = jax.random.normal(k2, (B, N, D), dtype=jnp.float32)
    answer_emb = jax.random.normal(k3, (B, D), dtype=jnp.float32)
    answer_emb_neg = jax.random.normal(k4, (B, N, D), dtype=jnp.float32)

    loss = embedding_loss_distmult(query_emb, query_emb_neg, answer_emb, answer_emb_neg)
    loss = jax.block_until_ready(loss)
    ref = _reference(query_emb, query_emb_neg, answer_emb, answer_emb_neg)
    assert jnp.allclose(loss, ref, rtol=1e-5, atol=1e-5), (loss, ref)

    # Second test: exercises batch padding/masking and the 2-split parallel path.
    B2, N2, D2 = 20, 3, 32
    k5, k6, k7, k8 = jax.random.split(jax.random.PRNGKey(1), 4)
    q2 = jax.random.normal(k5, (B2, D2), dtype=jnp.float32)
    qn2 = jax.random.normal(k6, (B2, N2, D2), dtype=jnp.float32)
    a2 = jax.random.normal(k7, (B2, D2), dtype=jnp.float32)
    an2 = jax.random.normal(k8, (B2, N2, D2), dtype=jnp.float32)
    loss2 = jax.block_until_ready(embedding_loss_distmult(q2, qn2, a2, an2, block_b=8))
    ref2 = _reference(q2, qn2, a2, an2)
    assert jnp.allclose(loss2, ref2, rtol=1e-5, atol=1e-5), (loss2, ref2)

    print("KERNEL_OK")
</pallas_src>

<mosaic_0001>
module attributes {stable_mosaic.version = 11 : i64} {
  func.func @_distmult_loss_kernel(%arg0: i32, %arg1: i32, %arg2: memref<8x32xf32, #tpu.memory_space<vmem>>, %arg3: memref<8x32xf32, #tpu.memory_space<vmem>>, %arg4: memref<32x32xf32, #tpu.memory_space<vmem>>, %arg5: memref<32x32xf32, #tpu.memory_space<vmem>>, %arg6: memref<8x128xf32, #tpu.memory_space<vmem>>, %arg7: memref<1x1xf32, #tpu.memory_space<vmem>>) attributes {dimension_semantics = [#tpu.dimension_semantics<parallel>, #tpu.dimension_semantics<arbitrary>], iteration_bounds = array<i64: 1, 1>, scalar_prefetch = 0 : i64, scratch_operands = 1 : i64, tpu.core_type = #tpu.core_type<tc>, window_params = [{transform_indices = @transform_0, window_bounds = array<i64: 8, 32>}, {transform_indices = @transform_1, window_bounds = array<i64: 8, 32>}, {transform_indices = @transform_2, window_bounds = array<i64: 32, 32>}, {transform_indices = @transform_3, window_bounds = array<i64: 32, 32>}, {transform_indices = @transform_4, window_bounds = array<i64: 8, 128>}]} {
    %c0_i32 = arith.constant 0 : i32
    %0 = arith.cmpi eq, %arg1, %c0_i32 : i32
    %1 = arith.extui %0 : i1 to i32
    %c0_i32_0 = arith.constant 0 : i32
    %2 = arith.cmpi ne, %1, %c0_i32_0 : i32
    scf.if %2 {
      %cst_25 = arith.constant 0.000000e+00 : f32
      %52 = vector.broadcast %cst_25 : f32 to vector<1x1xf32>
      %c0_26 = arith.constant 0 : index
      %c0_27 = arith.constant 0 : index
      %53 = vector.load %arg7[%c0_26, %c0_27] : memref<1x1xf32, #tpu.memory_space<vmem>>, vector<1x1xf32>
      tpu.vector_store %arg7[%c0_26, %c0_27], %52 {strides = array<i32>} : memref<1x1xf32, #tpu.memory_space<vmem>>, vector<1x1xf32>,
    } else {
    }
    %c0 = arith.constant 0 : index
    %c0_1 = arith.constant 0 : index
    %3 = vector.load %arg2[%c0, %c0_1] : memref<8x32xf32, #tpu.memory_space<vmem>>, vector<8x32xf32>
    %c0_2 = arith.constant 0 : index
    %c0_3 = arith.constant 0 : index
    %4 = vector.load %arg3[%c0_2, %c0_3] : memref<8x32xf32, #tpu.memory_space<vmem>>, vector<8x32xf32>
    %c0_4 = arith.constant 0 : index
    %c0_5 = arith.constant 0 : index
    %5 = vector.load %arg4[%c0_4, %c0_5] : memref<32x32xf32, #tpu.memory_space<vmem>>, vector<32x32xf32>
    %c0_6 = arith.constant 0 : index
    %c0_7 = arith.constant 0 : index
    %6 = vector.load %arg5[%c0_6, %c0_7] : memref<32x32xf32, #tpu.memory_space<vmem>>, vector<32x32xf32>
    %7 = arith.mulf %3, %4 : vector<8x32xf32>
    %cst = arith.constant dense<0.000000e+00> : vector<8xf32>
    %8 = vector.multi_reduction <add>, %7, %cst [1] : vector<8x32xf32> to vector<8xf32>
    %9 = vector.shape_cast %8 : vector<8xf32> to vector<8x1xf32>
    %10 = arith.mulf %5, %6 : vector<32x32xf32>
    %cst_8 = arith.constant dense<0.000000e+00> : vector<32xf32>
    %11 = vector.multi_reduction <add>, %10, %cst_8 [1] : vector<32x32xf32> to vector<32xf32>
    %12 = vector.shape_cast %11 : vector<32xf32> to vector<32x1xf32>
    %cst_9 = arith.constant 0.000000e+00 : f32
    %13 = vector.broadcast %cst_9 : f32 to vector<8x1xf32>
    %14 = arith.minimumf %9, %13 : vector<8x1xf32>
    %15 = math.absf %9 : vector<8x1xf32>
    %cst_10 = arith.constant 0.000000e+00 : f32
    %16 = vector.broadcast %cst_10 : f32 to vector<8x1xf32>
    %17 = arith.subf %16, %15 : vector<8x1xf32>
    %18 = math.exp %17 : vector<8x1xf32>
    %19 = math.log1p %18 : vector<8x1xf32>
    %20 = arith.subf %14, %19 : vector<8x1xf32>
    %cst_11 = arith.constant 0.000000e+00 : f32
    %21 = vector.broadcast %cst_11 : f32 to vector<8x1xf32>
    %22 = arith.subf %21, %20 : vector<8x1xf32>
    %cst_12 = arith.constant 0.000000e+00 : f32
    %23 = vector.broadcast %cst_12 : f32 to vector<32x1xf32>
    %24 = arith.subf %23, %12 : vector<32x1xf32>
    %cst_13 = arith.constant 0.000000e+00 : f32
    %25 = vector.broadcast %cst_13 : f32 to vector<32x1xf32>
    %26 = arith.minimumf %24, %25 : vector<32x1xf32>
    %27 = math.absf %24 : vector<32x1xf32>
    %cst_14 = arith.constant 0.000000e+00 : f32
    %28 = vector.broadcast %cst_14 : f32 to vector<32x1xf32>
    %29 = arith.subf %28, %27 : vector<32x1xf32>
    %30 = math.exp %29 : vector<32x1xf32>
    %31 = math.log1p %30 : vector<32x1xf32>
    %32 = arith.subf %26, %31 : vector<32x1xf32>
    %cst_15 = arith.constant 0.000000e+00 : f32
    %33 = vector.broadcast %cst_15 : f32 to vector<32x1xf32>
    %34 = arith.subf %33, %32 : vector<32x1xf32>
    %35 = vector.shape_cast %22 : vector<8x1xf32> to vector<1x8x1xf32>
    %cst_16 = arith.constant dense<0.000000e+00> : vector<1xf32>
    %36 = vector.multi_reduction <add>, %35, %cst_16 [1, 2] : vector<1x8x1xf32> to vector<1xf32>
    %37 = vector.shape_cast %36 : vector<1xf32> to vector<1x1x1xf32>
    %38 = vector.extract %37[0, 0, 0] : f32 from vector<1x1x1xf32>
    %39 = vector.shape_cast %34 : vector<32x1xf32> to vector<1x32x1xf32>
    %cst_17 = arith.constant dense<0.000000e+00> : vector<1xf32>
    %40 = vector.multi_reduction <add>, %39, %cst_17 [1, 2] : vector<1x32x1xf32> to vector<1xf32>
    %41 = vector.shape_cast %40 : vector<1xf32> to vector<1x1x1xf32>
    %42 = vector.extract %41[0, 0, 0] : f32 from vector<1x1x1xf32>
    %cst_18 = arith.constant 2.500000e-01 : f32
    %43 = arith.mulf %42, %cst_18 : f32
    %44 = arith.addf %38, %43 : f32
    %c0_19 = arith.constant 0 : index
    %c0_20 = arith.constant 0 : index
    %45 = vector.load %arg7[%c0_19, %c0_20] : memref<1x1xf32, #tpu.memory_space<vmem>>, vector<1x1xf32>
    %46 = vector.broadcast %44 : f32 to vector<1x1xf32>
    %47 = arith.addf %45, %46 : vector<1x1xf32>
    %c0_21 = arith.constant 0 : index
    %c0_22 = arith.constant 0 : index
    %48 = vector.load %arg7[%c0_21, %c0_22] : memref<1x1xf32, #tpu.memory_space<vmem>>, vector<1x1xf32>
    tpu.vector_store %arg7[%c0_21, %c0_22], %47 {strides = array<i32>} : memref<1x1xf32, #tpu.memory_space<vmem>>, vector<1x1xf32>,
    %c0_i32_23 = arith.constant 0 : i32
    %49 = arith.cmpi eq, %arg1, %c0_i32_23 : i32
    %50 = arith.extui %49 : i1 to i32
    %c0_i32_24 = arith.constant 0 : i32
    %51 = arith.cmpi ne, %50, %c0_i32_24 : i32
    scf.if %51 {
      %c0_25 = arith.constant 0 : index
      %c0_26 = arith.constant 0 : index
      %52 = vector.load %arg7[%c0_25, %c0_26] : memref<1x1xf32, #tpu.memory_space<vmem>>, vector<1x1xf32>
      %cst_27 = arith.constant 6.250000e-02 : f32
      %53 = vector.broadcast %cst_27 : f32 to vector<1x1xf32>
      %54 = arith.mulf %52, %53 : vector<1x1xf32>
      %55 = vector.shape_cast %54 : vector<1x1xf32> to vector<1x1xf32>
      %56 = vector.broadcast %55 : vector<1x1xf32> to vector<8x128xf32>
      %c0_28 = arith.constant 0 : index
      %c0_29 = arith.constant 0 : index
      %57 = vector.load %arg6[%c0_28, %c0_29] : memref<8x128xf32, #tpu.memory_space<vmem>>, vector<8x128xf32>
      tpu.vector_store %arg6[%c0_28, %c0_29], %56 {strides = array<i32>} : memref<8x128xf32, #tpu.memory_space<vmem>>, vector<8x128xf32>,
    } else {
    }
    return
  }
  func.func @transform_0(%arg0: i32, %arg1: i32) -> (i32, i32) {
    %c1_i32 = arith.constant 1 : i32
    %0 = arith.muli %arg0, %c1_i32 : i32
    %1 = arith.addi %0, %arg1 : i32
    %c0_i32 = arith.constant 0 : i32
    %c0_i32_0 = arith.constant 0 : i32
    return %1, %c0_i32 : i32, i32
  }
  func.func @transform_1(%arg0: i32, %arg1: i32) -> (i32, i32) {
    %c1_i32 = arith.constant 1 : i32
    %0 = arith.muli %arg0, %c1_i32 : i32
    %1 = arith.addi %0, %arg1 : i32
    %c0_i32 = arith.constant 0 : i32
    %c0_i32_0 = arith.constant 0 : i32
    return %1, %c0_i32 : i32, i32
  }
  func.func @transform_2(%arg0: i32, %arg1: i32) -> (i32, i32) {
    %c1_i32 = arith.constant 1 : i32
    %0 = arith.muli %arg0, %c1_i32 : i32
    %1 = arith.addi %0, %arg1 : i32
    %c0_i32 = arith.constant 0 : i32
    %c0_i32_0 = arith.constant 0 : i32
    return %1, %c0_i32 : i32, i32
  }
  func.func @transform_3(%arg0: i32, %arg1: i32) -> (i32, i32) {
    %c1_i32 = arith.constant 1 : i32
    %0 = arith.muli %arg0, %c1_i32 : i32
    %1 = arith.addi %0, %arg1 : i32
    %c0_i32 = arith.constant 0 : i32
    %c0_i32_0 = arith.constant 0 : i32
    return %1, %c0_i32 : i32, i32
  }
  func.func @transform_4(%arg0: i32, %arg1: i32) -> (i32, i32) {
    %c0_i32 = arith.constant 0 : i32
    %c0_i32_0 = arith.constant 0 : i32
    return %arg0, %c0_i32 : i32, i32
  }
}

</mosaic_0001>

<llo_original>
// kernel: tpu_custom_call.1
$region0: #{tpu_custom_call.1}
  #allocation0 [shape = 'u32[]', space=smem, size = 0x4, offset = 0x4, fixed_abs, tag = 'smem constant byte address 0x4 - core index']
  #allocation1 [shape = 'u32[144,128]{1,0:T(1,128)}', space=vmem, size = 0x12000, scoped, tag = 'internal scratch']
  #allocation2 [shape = 'f32[1,1]{1,0:T(1,128)}', space=vmem, size = 0x200, scoped, tag = 'scratch operand']
  %s0 = inlined_call_operand.hbm [shape: f32[8,32], index: 0, kind: input, shape index: {}]
  %s1 = inlined_call_operand.hbm [shape: f32[8,32], index: 1, kind: input, shape index: {}]
  %s2 = inlined_call_operand.hbm [shape: f32[32,32], index: 2, kind: input, shape index: {}]
  %s3 = inlined_call_operand.hbm [shape: f32[32,32], index: 3, kind: input, shape index: {}]
  %s4 = inlined_call_operand.hbm [shape: f32[8,128], index: 4, kind: output, shape index: {}]
  %s5 = sld [smem:[#allocation0]]
  $region50: #{tpu_custom_call.1} parent=0
    _
  %s7 = ssub.s32 1, %s5
  %s8 = scalar_select 0, %s7, %s5
  $region1: #{tpu_custom_call.1} parent=0
    #allocation3 [shape = 'u8[4096]{0}', space=vmem, size = 0x1000, scoped, tag = 'input window, operand 0, single buffered']
    #allocation4 [shape = 's32[1]{0}', space=sflag, size = 0x4, scoped, tag = 'scoped memory for tpu_custom_call.1']
    #allocation5 [shape = 's32[1]{0}', space=sflag, size = 0x4, scoped, tag = 'scoped memory for tpu_custom_call.1']
    #allocation6 [shape = 'u8[4096]{0}', space=vmem, size = 0x1000, scoped, tag = 'input window, operand 1, single buffered']
    #allocation7 [shape = 's32[1]{0}', space=sflag, size = 0x4, scoped, tag = 'scoped memory for tpu_custom_call.1']
    #allocation8 [shape = 'u8[16384]{0}', space=vmem, size = 0x4000, scoped, tag = 'input window, operand 2, single buffered']
    #allocation9 [shape = 'u8[16384]{0}', space=vmem, size = 0x4000, scoped, tag = 'input window, operand 3, single buffered']
    #allocation10 [shape = 's32[1]{0}', space=sflag, size = 0x4, scoped, tag = 'scoped memory for tpu_custom_call.1']
    #allocation11 [shape = 'u8[4096]{0}', space=vmem, size = 0x1000, scoped, tag = 'output window, operand 0, single buffered']
    %9 = vsyncpa [#allocation4], 0
    %10 = vsyncpa [#allocation7], 0
    %11 = vsyncpa [#allocation10], 0
    %12 = vsyncpa [#allocation5], 0
    // Predicated region
    $region2: #{tpu_custom_call.1} parent=1 // pred_check
      _
    $region3: #{tpu_custom_call.1} parent=1 // pred_check_branch
      %14 = sbr.rel (0) target = $region5
    $region4: #{tpu_custom_call.1} parent=1 // pred_region
      %s15 = sadd.s32 0, 0
      %s17 = ssub.s32 128, 128
      %18 = vsyncadd [#allocation4], %s17
      %s19 = smul.addr %s15, 128
      %s20 = scalar_lea.hbm %s0, %s19
      %s22 = sshll.u32 [#allocation3], 4
      %s23 = int_to_ptr.vmem [resolvable:$true] %s22
      %25 = dma.hbm_to_vmem [thread:$0]  %s20, 128, %s23, [#allocation4]
    $region5: #{tpu_custom_call.1} parent=1 // pred_fallthru
      _
    // Predicated region
    $region6: #{tpu_custom_call.1} parent=1 // pred_check
      _
    $region7: #{tpu_custom_call.1} parent=1 // pred_check_branch
      %27 = sbr.rel (0) target = $region9
    $region8: #{tpu_custom_call.1} parent=1 // pred_region
      %s28 = sadd.s32 0, 0
      %s30 = ssub.s32 128, 128
      %31 = vsyncadd [#allocation7], %s30
      %s32 = smul.addr %s28, 128
      %s33 = scalar_lea.hbm %s1, %s32
      %s35 = sshll.u32 [#allocation6], 4
      %s36 = int_to_ptr.vmem [resolvable:$true] %s35
      %38 = dma.hbm_to_vmem [thread:$0]  %s33, 128, %s36, [#allocation7]
    $region9: #{tpu_custom_call.1} parent=1 // pred_fallthru
      _
    // Predicated region
    $region10: #{tpu_custom_call.1} parent=1 // pred_check
      _
    $region11: #{tpu_custom_call.1} parent=1 // pred_check_branch
      %40 = sbr.rel (0) target = $region13
    $region12: #{tpu_custom_call.1} parent=1 // pred_region
      %s41 = sadd.s32 0, 0
      %s42 = smul.u32 4, %s41
      %s44 = ssub.s32 512, 512
      %45 = vsyncadd [#allocation7], %s44
      %s46 = smul.addr %s42, 128
      %s47 = scalar_lea.hbm %s2, %s46
      %s48 = sshll.u32 [#allocation8], 4
      %s49 = int_to_ptr.vmem [resolvable:$true] %s48
      %54 = dma.hbm_to_vmem [thread:$0]  %s47, 512, %s49, [#allocation7], 128, 128, 8
    $region13: #{tpu_custom_call.1} parent=1 // pred_fallthru
      _
    // Predicated region
    $region14: #{tpu_custom_call.1} parent=1 // pred_check
      _
    $region15: #{tpu_custom_call.1} parent=1 // pred_check_branch
      %56 = sbr.rel (0) target = $region17
    $region16: #{tpu_custom_call.1} parent=1 // pred_region
      %s57 = sadd.s32 0, 0
      %s58 = smul.u32 4, %s57
      %s60 = ssub.s32 512, 512
      %61 = vsyncadd [#allocation10], %s60
      %s62 = smul.addr %s58, 128
      %s63 = scalar_lea.hbm %s3, %s62
      %s64 = sshll.u32 [#allocation9], 4
      %s65 = int_to_ptr.vmem [resolvable:$true] %s64
      %70 = dma.hbm_to_vmem [thread:$0]  %s63, 512, %s65, [#allocation10], 128, 128, 8
    $region17: #{tpu_custom_call.1} parent=1 // pred_fallthru
      _
    // Predicated region
    $region18: #{tpu_custom_call.1} parent=1 // pred_check
      _
    $region19: #{tpu_custom_call.1} parent=1 // pred_check_branch
      %72 = sbr.rel (0) target = $region21
    $region20: #{tpu_custom_call.1} parent=1 // pred_region
      %73 = dma.done [#allocation4], 128
    $region21: #{tpu_custom_call.1} parent=1 // pred_fallthru
      _
    // Predicated region
    $region22: #{tpu_custom_call.1} parent=1 // pred_check
      _
    $region23: #{tpu_custom_call.1} parent=1 // pred_check_branch
      %75 = sbr.rel (0) target = $region25
    $region24: #{tpu_custom_call.1} parent=1 // pred_region
      %76 = dma.done [#allocation7], 128
    $region25: #{tpu_custom_call.1} parent=1 // pred_fallthru
      _
    // Predicated region
    $region26: #{tpu_custom_call.1} parent=1 // pred_check
      _
    $region27: #{tpu_custom_call.1} parent=1 // pred_check_branch
      %78 = sbr.rel (0) target = $region29
    $region28: #{tpu_custom_call.1} parent=1 // pred_region
      %79 = dma.done [#allocation7], 512
    $region29: #{tpu_custom_call.1} parent=1 // pred_fallthru
      _
    // Predicated region
    $region30: #{tpu_custom_call.1} parent=1 // pred_check
      _
    $region31: #{tpu_custom_call.1} parent=1 // pred_check_branch
      %81 = sbr.rel (0) target = $region33
    $region32: #{tpu_custom_call.1} parent=1 // pred_region
      %82 = dma.done [#allocation10], 512
    $region33: #{tpu_custom_call.1} parent=1 // pred_fallthru
      _
    %s83 = sadd.s32 0, 0
    %s84 = sadd.s32 0, 0
    %s85 = sadd.s32 0, 0
    %s86 = smul.u32 4, %s85
    %s87 = sadd.s32 0, 0
    %s88 = smul.u32 4, %s87
    %p89 = scmp.eq.s32.totalorder 0, 0
    // Predicated region
    $region34: #{tpu_custom_call.1} parent=1 // pred_check
      %p90 = pneg %p89
    $region35: #{tpu_custom_call.1} parent=1 // pred_check_branch
      %92 = sbr.rel (%p90) target = $region37
    $region36: #{tpu_custom_call.1} parent=1 // pred_region
      %vm93 = vcmask 0
      %94 = vst.msk [vmem:[#allocation2] sm:$0x1] %vm93, 0.0
    $region37: #{tpu_custom_call.1} parent=1 // pred_fallthru
      _
    %v95 = vld [vmem:[#allocation3] sm:$0xff]
    %v96 = vld [vmem:[#allocation6] sm:$0xff]
    %v97 = vld [vmem:[#allocation8] sm:$0xff]
    %v98 = vld [vmem:[#allocation8 + $0x8] sm:$0xff]
    %v99 = vld [vmem:[#allocation8 + $0x10] sm:$0xff]
    %v100 = vld [vmem:[#allocation8 + $0x18] sm:$0xff]
    %v101 = vld [vmem:[#allocation9] sm:$0xff]
    %v102 = vld [vmem:[#allocation9 + $0x8] sm:$0xff]
    %v103 = vld [vmem:[#allocation9 + $0x10] sm:$0xff]
    %v104 = vld [vmem:[#allocation9 + $0x18] sm:$0xff]
    %v105 = vmul.f32 %v95, %v96
    %vm106 = vcmask 261120
    %v107 = vsel %vm106, %v105, 0.0
    %108 = vadd.xlane.f32.xlu0 %v107
    %v109 = vpop.xlane.xlu0 %108
    %v110 = vmul.f32 %v97, %v101
    %v111 = vmul.f32 %v98, %v102
    %v112 = vmul.f32 %v99, %v103
    %v113 = vmul.f32 %v100, %v104
    %v114 = vsel %vm106, %v110, 0.0
    %115 = vadd.xlane.f32.xlu0 %v114
    %v116 = vpop.xlane.xlu0 %115
    %v117 = vsel %vm106, %v111, 0.0
    %118 = vadd.xlane.f32.xlu0 %v117
    %v119 = vpop.xlane.xlu0 %118
    %v120 = vsel %vm106, %v112, 0.0
    %121 = vadd.xlane.f32.xlu0 %v120
    %v122 = vpop.xlane.xlu0 %121
    %v123 = vsel %vm106, %v113, 0.0
    %124 = vadd.xlane.f32.xlu0 %v123
    %v125 = vpop.xlane.xlu0 %124
    %v126 = vmin.f32 %v109, 0.0
    %v127 = vand.u32 2147483647, %v109
    %v128 = vsub.f32 0.0, %v127
    %v129 = vmul.f32 %v128, 1.442695
    %v130 = vpow.pop %v129
    %v131 = vadd.f32 %v130, 1.0
    %v132 = vlog2.pop %v131
    %v133 = vmul.f32 %v132, 0.6931472
    %v134 = vmul.f32 -0.5, %v130
    %v135 = vadd.f32 %v134, 1.0
    %v136 = vmul.f32 %v135, %v130
    %v137 = vand.u32 2147483647, %v130
    %vm138 = vcmp.lt.f32.partialorder %v137, 0.0004427343
    %v139 = vsel %vm138, %v136, %v133
    %v140 = vsub.f32 %v126, %v139
    %v141 = vsub.f32 0.0, %v140
    %v142 = vsub.f32 0.0, %v116
    %v143 = vsub.f32 0.0, %v119
    %v144 = vsub.f32 0.0, %v122
    %v145 = vsub.f32 0.0, %v125
    %v146 = vmin.f32 %v142, 0.0
    %v147 = vmin.f32 %v143, 0.0
    %v148 = vmin.f32 %v144, 0.0
    %v149 = vmin.f32 %v145, 0.0
    %v150 = vand.u32 2147483647, %v142
    %v151 = vand.u32 2147483647, %v143
    %v152 = vand.u32 2147483647, %v144
    %v153 = vand.u32 2147483647, %v145
    %v154 = vsub.f32 0.0, %v150
    %v155 = vsub.f32 0.0, %v151
    %v156 = vsub.f32 0.0, %v152
    %v157 = vsub.f32 0.0, %v153
    %v158 = vmul.f32 %v154, 1.442695
    %v159 = vpow.pop %v158
    %v160 = vmul.f32 %v155, 1.442695
    %v161 = vpow.pop %v160
    %v162 = vmul.f32 %v156, 1.442695
    %v163 = vpow.pop %v162
    %v164 = vmul.f32 %v157, 1.442695
    %v165 = vpow.pop %v164
    %v166 = vadd.f32 %v159, 1.0
    %v167 = vlog2.pop %v166
    %v168 = vmul.f32 %v167, 0.6931472
    %v169 = vmul.f32 -0.5, %v159
    %v170 = vadd.f32 %v169, 1.0
    %v171 = vmul.f32 %v170, %v159
    %v172 = vand.u32 2147483647, %v159
    %vm173 = vcmp.lt.f32.partialorder %v172, 0.0004427343
    %v174 = vsel %vm173, %v171, %v168
    %v175 = vadd.f32 %v161, 1.0
    %v176 = vlog2.pop %v175
    %v177 = vmul.f32 %v176, 0.6931472
    %v178 = vmul.f32 -0.5, %v161
    %v179 = vadd.f32 %v178, 1.0
    %v180 = vmul.f32 %v179, %v161
    %v181 = vand.u32 2147483647, %v161
    %vm182 = vcmp.lt.f32.partialorder %v181, 0.0004427343
    %v183 = vsel %vm182, %v180, %v177
    %v184 = vadd.f32 %v163, 1.0
    %v185 = vlog2.pop %v184
    %v186 = vmul.f32 %v185, 0.6931472
    %v187 = vmul.f32 -0.5, %v163
    %v188 = vadd.f32 %v187, 1.0
    %v189 = vmul.f32 %v188, %v163
    %v190 = vand.u32 2147483647, %v163
    %vm191 = vcmp.lt.f32.partialorder %v190, 0.0004427343
    %v192 = vsel %vm191, %v189, %v186
    %v193 = vadd.f32 %v165, 1.0
    %v194 = vlog2.pop %v193
    %v195 = vmul.f32 %v194, 0.6931472
    %v196 = vmul.f32 -0.5, %v165
    %v197 = vadd.f32 %v196, 1.0
    %v198 = vmul.f32 %v197, %v165
    %v199 = vand.u32 2147483647, %v165
    %vm200 = vcmp.lt.f32.partialorder %v199, 0.0004427343
    %v201 = vsel %vm200, %v198, %v195
    %v202 = vsub.f32 %v146, %v174
    %v203 = vsub.f32 %v147, %v183
    %v204 = vsub.f32 %v148, %v192
    %v205 = vsub.f32 %v149, %v201
    %v206 = vsub.f32 0.0, %v202
    %v207 = vsub.f32 0.0, %v203
    %v208 = vsub.f32 0.0, %v204
    %v209 = vsub.f32 0.0, %v205
    %vm210 = vcmask 7168
    %v211 = vsel %vm210, %v141, 0.0
    %212 = vadd.xlane.f32.xlu0 %v211
    %v213 = vpop.xlane.xlu0 %212
    %v214 = vrot.slane %v213, 4
    %v215 = vadd.f32 %v213, %v214
    %v216 = vrot.slane %v215, 2
    %v217 = vadd.f32 %v215, %v216
    %v218 = vrot.slane %v217, 1
    %v219 = vadd.f32 %v217, %v218
    %s220 = vtos %v219
    %v221 = vsel %vm210, %v206, 0.0
    %v222 = vsel %vm210, %v207, 0.0
    %v223 = vadd.f32 %v221, %v222
    %v224 = vsel %vm210, %v208, 0.0
    %v225 = vadd.f32 %v223, %v224
    %v226 = vsel %vm210, %v209, 0.0
    %v227 = vadd.f32 %v225, %v226
    %228 = vadd.xlane.f32.xlu0 %v227
    %v229 = vpop.xlane.xlu0 %228
    %v230 = vrot.slane %v229, 4
    %v231 = vadd.f32 %v229, %v230
    %v232 = vrot.slane %v231, 2
    %v233 = vadd.f32 %v231, %v232
    %v234 = vrot.slane %v233, 1
    %v235 = vadd.f32 %v233, %v234
    %s236 = vtos %v235
    %s237 = smul.f32 %s236, 0.25
    %s238 = sadd.f32 %s220, %s237
    %v239 = vld [vmem:[#allocation2] sm:$0x1]
    %v240 = vstv %s238
    %v241 = vadd.f32 %v239, %v240
    %vm242 = vcmask 0
    %243 = vst.msk [vmem:[#allocation2] sm:$0x1] %vm242, %v241
    // Predicated region
    $region38: #{tpu_custom_call.1} parent=1 // pred_check
      %p244 = pneg %p89
    $region39: #{tpu_custom_call.1} parent=1 // pred_check_branch
      %246 = sbr.rel (%p244) target = $region41
    $region40: #{tpu_custom_call.1} parent=1 // pred_region
      %v247 = vld [vmem:[#allocation2] sm:$0x1]
      %v248 = vmul.f32 %v247, 0.0625
      %v250 = vlaneseq
      %v251 = vshrl.u32 %v250, 7
      %v252 = vsub.s32 0, %v251
      %v253 = vrot.slane %v248, %v252
      %254 = vset.pattern.permute.xlu0 0
      %255 = vperm.xlu0 %254, %v253
      %v256 = vpop.permute.xlu0 %255
      %258 = vst [vmem:[#allocation11] sm:$0xff] %v256
    $region41: #{tpu_custom_call.1} parent=1 // pred_fallthru
      _
    // Predicated region
    $region42: #{tpu_custom_call.1} parent=1 // pred_check
      _
    $region43: #{tpu_custom_call.1} parent=1 // pred_check_branch
      %260 = sbr.rel (0) target = $region45
    $region44: #{tpu_custom_call.1} parent=1 // pred_region
      %s262 = ssub.s32 128, 128
      %263 = vsyncadd [#allocation5], %s262
      %s265 = sshll.u32 [#allocation11], 4
      %s266 = int_to_ptr.vmem [resolvable:$true] %s265
      %268 = dma.vmem_to_hbm [thread:$0]  %s266, 128, %s4, [#allocation5]
    $region45: #{tpu_custom_call.1} parent=1 // pred_fallthru
      _
    // Predicated region
    $region46: #{tpu_custom_call.1} parent=1 // pred_check
      _
    $region47: #{tpu_custom_call.1} parent=1 // pred_check_branch
      %270 = sbr.rel (0) target = $region49
    $region48: #{tpu_custom_call.1} parent=1 // pred_region
      %271 = dma.done [#allocation5], 128
    $region49: #{tpu_custom_call.1} parent=1 // pred_fallthru
      _
    %272 = vsyncpa [#allocation4], 1
    %273 = vsyncpa [#allocation7], 1
    %274 = vsyncpa [#allocation10], 1
    %275 = vsyncpa [#allocation5], 1

</llo_original>
